<compile_context>
chip_gen: v7x
topology: tpu7x:2x2x1
jax: 0.10.0
libtpu: 0.0.40
codegen_flags: <defaults>
</compile_context>

<pallas_src>
import functools

import jax
import jax.numpy as jnp
from jax.experimental import pallas as pl
from jax.experimental.pallas import tpu as pltpu


def _vmlp_kernel(x_ref, w1_ref, b1_ref, wh_ref, bh_ref, eps_ref,
                 z_ref, lv_ref, mu_ref, *, z_dim):
    # Hidden layer: Linear + ReLU.  MXU accumulates in f32 regardless of input dtype.
    h = jnp.dot(x_ref[...], w1_ref[...], preferred_element_type=jnp.float32) + b1_ref[...]
    h = jnp.maximum(h, 0.0)

    # Fused heads: a single MXU matmul produces [tile_b, 2Z] = logvar | mu.
    # h stays f32 so post-matmul math keeps full precision (bf16 only trims HBM reads).
    heads = jnp.dot(h, wh_ref[...].astype(jnp.float32),
                    preferred_element_type=jnp.float32) + bh_ref[...]
    logvar = heads[:, :z_dim]
    mu = heads[:, z_dim:]

    # Reparameterization trick; exp(0.5*x) == sqrt(exp(x)) with a single transcendental.
    z = jnp.exp(0.5 * logvar) * eps_ref[...] + mu

    z_ref[...] = z
    lv_ref[...] = logvar
    mu_ref[...] = mu


def _round_up(n, m):
    return -(-n // m) * m


def _pick_tile_b(batch, in_features, z_dim, x_itemsize):
    # Streamed bytes per batch row, double-buffered by the BlockSpec pipeline:
    #   x in (x_itemsize*F), eps in (4*Z), z/logvar/mu out (3*4*Z).
    bytes_per_row = 2 * (x_itemsize * in_features + 4 * z_dim + 3 * 4 * z_dim)
    budget_bytes = 8 * 1024 * 1024          # conservative: safe on v7x (32 MiB scoped/TC)
    cap = max(8, min(4096, (budget_bytes // bytes_per_row) // 8 * 8))

    if batch <= 512:
        # Tiny batch: one (or as few as possible) grid steps; ~0.35 us/step overhead
        # dwarfs the actual work at these dimensions.
        return min(batch, cap)

    # Larger batch: an even number (>=2) of large tiles so v7x's two TensorCores both get
    # work under dimension_semantics=("parallel",); v5e/v6e just see bigger DMA chunks.
    steps = max(2, pl.cdiv(batch, cap))
    steps += steps % 2
    return min(batch, max(8, _round_up(pl.cdiv(batch, steps), 8)))


def variational_mlp_forward(x, w1, b1, wlv, blv, wmu, bmu, eps, *,
                            tile_b=None, compute_dtype=jnp.bfloat16):
    """VariationalMLP forward.

    x: [B, F]; w1: [F, H]; b1: [1, H]; wlv/wmu: [H, Z]; blv/bmu: [1, Z]; eps: [B, Z].
    Weights are stored [in_dim, out_dim] so x @ W + b matches PyTorch's x @ W.T + b.

    compute_dtype: dtype used to stream x / W1 / W_heads into the MXU (bf16 by default to
    halve the dominant HBM read; pass jnp.float32 for exact f32 numerics).  All post-matmul
    math, eps and the outputs are f32.

    Returns (z, logvar, mu), each [B, Z] float32.
    """
    B, F = x.shape
    H = w1.shape[1]
    Z = wmu.shape[1]

    # Fuse the two Z-wide heads into a single matmul: columns = logvar | mu.
    w_heads = jnp.concatenate([wlv, wmu], axis=1).astype(compute_dtype)   # [H, 2Z]
    b_heads = jnp.concatenate([blv, bmu], axis=1).astype(jnp.float32)     # [1, 2Z]

    x_c = x.astype(compute_dtype)
    w1_c = w1.astype(compute_dtype)
    b1_f = b1.astype(jnp.float32)
    eps_f = eps.astype(jnp.float32)

    if tile_b is None:
        tile_b = _pick_tile_b(B, F, Z, jnp.dtype(compute_dtype).itemsize)
    tile_b = min(tile_b, B)
    grid = (pl.cdiv(B, tile_b),)

    kernel = functools.partial(_vmlp_kernel, z_dim=Z)
    out_shape = (jax.ShapeDtypeStruct((B, Z), jnp.float32),   # z
                 jax.ShapeDtypeStruct((B, Z), jnp.float32),   # logvar
                 jax.ShapeDtypeStruct((B, Z), jnp.float32))   # mu

    z, logvar, mu = pl.pallas_call(
        kernel,
        out_shape=out_shape,
        grid=grid,
        in_specs=[
            pl.BlockSpec((tile_b, F), lambda i: (i, 0)),    # x: streamed per batch tile
            # Constant (0,0) index maps -> fetched once, VMEM-resident across the grid
            # (Pallas only re-issues a block DMA when the block index changes).
            pl.BlockSpec((F, H), lambda i: (0, 0)),         # w1
            pl.BlockSpec((1, H), lambda i: (0, 0)),         # b1
            pl.BlockSpec((H, 2 * Z), lambda i: (0, 0)),     # fused head weights
            pl.BlockSpec((1, 2 * Z), lambda i: (0, 0)),     # fused head biases
            pl.BlockSpec((tile_b, Z), lambda i: (i, 0)),    # eps: streamed per batch tile
        ],
        out_specs=[
            pl.BlockSpec((tile_b, Z), lambda i: (i, 0)),    # z
            pl.BlockSpec((tile_b, Z), lambda i: (i, 0)),    # logvar
            pl.BlockSpec((tile_b, Z), lambda i: (i, 0)),    # mu
        ],
        compiler_params=pltpu.CompilerParams(
            dimension_semantics=("parallel",),            # megacore / v7x 2-TC batch split
            vmem_limit_bytes=32 * 1024 * 1024,            # explicit: v5e default scope is 16 MiB
        ),
    )(x_c, w1_c, b1_f, w_heads, b_heads, eps_f)
    return z, logvar, mu


def _init_linear(key, fan_in, fan_out):
    """Deterministic init mirroring torch.nn.Linear defaults (Kaiming-uniform-ish)."""
    kw, kb = jax.random.split(key)
    bound = 1.0 / float(jnp.sqrt(float(fan_in)))
    w = jax.random.uniform(kw, (fan_in, fan_out), jnp.float32, -bound, bound)
    b = jax.random.uniform(kb, (1, fan_out), jnp.float32, -bound, bound)
    return w, b


if __name__ == "__main__":
    batch, in_features, hidden_dim, z_dim = 256, 32, 32, 16

    key = jax.random.PRNGKey(0)
    k_x, k_eps, k1, k2, k3 = jax.random.split(key, 5)

    x = jax.random.normal(k_x, (batch, in_features), jnp.float32)
    # TODO(synk): torch.randn_like(mu) is generated host-side and passed in as `eps`
    # (could be moved in-kernel with pltpu.prng_seed/prng_random_bits if desired).
    eps = jax.random.normal(k_eps, (batch, z_dim), jnp.float32)

    w1, b1 = _init_linear(k1, in_features, hidden_dim)
    wlv, blv = _init_linear(k2, hidden_dim, z_dim)
    wmu, bmu = _init_linear(k3, hidden_dim, z_dim)

    # ---- Exact-precision path: f32 operands, default tile (single grid step at B=256). ----
    z, logvar, mu = variational_mlp_forward(
        x, w1, b1, wlv, blv, wmu, bmu, eps, compute_dtype=jnp.float32)
    jax.block_until_ready((z, logvar, mu))

    hp = "highest"
    h_ref = jnp.maximum(jnp.dot(x, w1, precision=hp) + b1, 0.0)
    logvar_ref = jnp.dot(h_ref, wlv, precision=hp) + blv
    mu_ref = jnp.dot(h_ref, wmu, precision=hp) + bmu
    z_ref = jnp.sqrt(jnp.exp(logvar_ref)) * eps + mu_ref
    assert jnp.allclose(logvar, logvar_ref, atol=1e-4, rtol=1e-4)
    assert jnp.allclose(mu, mu_ref, atol=1e-4, rtol=1e-4)
    assert jnp.allclose(z, z_ref, atol=1e-4, rtol=1e-4)

    # ---- Performance path: bf16 matmul operands (default), tile_b=128 -> grid=(2,), ----
    # ---- exercising the pipelined BlockSpecs and the v7x two-TensorCore batch split. ----
    z_b, logvar_b, mu_b = variational_mlp_forward(
        x, w1, b1, wlv, blv, wmu, bmu, eps, tile_b=128)
    jax.block_until_ready((z_b, logvar_b, mu_b))

    # Reference with the same bf16 input rounding but f32 arithmetic (MXU accumulates in f32).
    rnd = lambda a: a.astype(jnp.bfloat16).astype(jnp.float32)
    h_b = jnp.maximum(jnp.dot(rnd(x), rnd(w1), precision=hp) + b1, 0.0)
    heads_b = (jnp.dot(h_b, rnd(jnp.concatenate([wlv, wmu], axis=1)), precision=hp)
               + jnp.concatenate([blv, bmu], axis=1))
    logvar_bref, mu_bref = heads_b[:, :z_dim], heads_b[:, z_dim:]
    z_bref = jnp.exp(0.5 * logvar_bref) * eps + mu_bref
    assert jnp.allclose(logvar_b, logvar_bref, atol=1e-3, rtol=1e-3)
    assert jnp.allclose(mu_b, mu_bref, atol=1e-3, rtol=1e-3)
    assert jnp.allclose(z_b, z_bref, atol=1e-3, rtol=1e-3)

    print("KERNEL_OK")
</pallas_src>

<mosaic_0001>
module attributes {stable_mosaic.version = 11 : i64} {
  func.func @_vmlp_kernel(%arg0: i32, %arg1: memref<256x32xf32, #tpu.memory_space<vmem>>, %arg2: memref<32x32xf32, #tpu.memory_space<vmem>>, %arg3: memref<1x32xf32, #tpu.memory_space<vmem>>, %arg4: memref<32x32xf32, #tpu.memory_space<vmem>>, %arg5: memref<1x32xf32, #tpu.memory_space<vmem>>, %arg6: memref<256x16xf32, #tpu.memory_space<vmem>>, %arg7: memref<256x16xf32, #tpu.memory_space<vmem>>, %arg8: memref<256x16xf32, #tpu.memory_space<vmem>>, %arg9: memref<256x16xf32, #tpu.memory_space<vmem>>) attributes {dimension_semantics = [#tpu.dimension_semantics<parallel>], iteration_bounds = array<i64: 1>, scalar_prefetch = 0 : i64, scratch_operands = 0 : i64, tpu.core_type = #tpu.core_type<tc>, window_params = [{transform_indices = @transform_0, window_bounds = array<i64: 256, 32>}, {pipeline_mode = #tpu.pipeline_mode<synchronous>, transform_indices = @transform_1, window_bounds = array<i64: 32, 32>}, {pipeline_mode = #tpu.pipeline_mode<synchronous>, transform_indices = @transform_2, window_bounds = array<i64: 1, 32>}, {pipeline_mode = #tpu.pipeline_mode<synchronous>, transform_indices = @transform_3, window_bounds = array<i64: 32, 32>}, {pipeline_mode = #tpu.pipeline_mode<synchronous>, transform_indices = @transform_4, window_bounds = array<i64: 1, 32>}, {transform_indices = @transform_5, window_bounds = array<i64: 256, 16>}, {transform_indices = @transform_6, window_bounds = array<i64: 256, 16>}, {transform_indices = @transform_7, window_bounds = array<i64: 256, 16>}, {transform_indices = @transform_8, window_bounds = array<i64: 256, 16>}]} {
    %c0 = arith.constant 0 : index
    %c0_0 = arith.constant 0 : index
    %0 = vector.load %arg1[%c0, %c0_0] : memref<256x32xf32, #tpu.memory_space<vmem>>, vector<256x32xf32>
    %c0_1 = arith.constant 0 : index
    %c0_2 = arith.constant 0 : index
    %1 = vector.load %arg2[%c0_1, %c0_2] : memref<32x32xf32, #tpu.memory_space<vmem>>, vector<32x32xf32>
    %cst = arith.constant dense<0.000000e+00> : vector<256x32xf32>
    %2 = tpu.matmul %0, %1, %cst {dimension_numbers = #tpu.dot_dimension_numbers<[1], [0], [0], [1], [0, 0, 1, 1], [], []>} : vector<256x32xf32>, vector<32x32xf32>, vector<256x32xf32> -> vector<256x32xf32>
    %c0_3 = arith.constant 0 : index
    %c0_4 = arith.constant 0 : index
    %3 = vector.load %arg3[%c0_3, %c0_4] : memref<1x32xf32, #tpu.memory_space<vmem>>, vector<1x32xf32>
    %4 = vector.broadcast %3 : vector<1x32xf32> to vector<256x32xf32>
    %5 = arith.addf %2, %4 : vector<256x32xf32>
    %cst_5 = arith.constant 0.000000e+00 : f32
    %6 = vector.broadcast %cst_5 : f32 to vector<256x32xf32>
    %7 = arith.maximumf %5, %6 : vector<256x32xf32>
    %c0_6 = arith.constant 0 : index
    %c0_7 = arith.constant 0 : index
    %8 = vector.load %arg4[%c0_6, %c0_7] : memref<32x32xf32, #tpu.memory_space<vmem>>, vector<32x32xf32>
    %cst_8 = arith.constant dense<0.000000e+00> : vector<256x32xf32>
    %9 = tpu.matmul %7, %8, %cst_8 {dimension_numbers = #tpu.dot_dimension_numbers<[1], [0], [0], [1], [0, 0, 1, 1], [], []>} : vector<256x32xf32>, vector<32x32xf32>, vector<256x32xf32> -> vector<256x32xf32>
    %c0_9 = arith.constant 0 : index
    %c0_10 = arith.constant 0 : index
    %10 = vector.load %arg5[%c0_9, %c0_10] : memref<1x32xf32, #tpu.memory_space<vmem>>, vector<1x32xf32>
    %11 = vector.broadcast %10 : vector<1x32xf32> to vector<256x32xf32>
    %12 = arith.addf %9, %11 : vector<256x32xf32>
    %13 = vector.extract_strided_slice %12 {offsets = [0, 0], sizes = [256, 16], strides = [1, 1]} : vector<256x32xf32> to vector<256x16xf32>
    %14 = vector.extract_strided_slice %12 {offsets = [0, 16], sizes = [256, 16], strides = [1, 1]} : vector<256x32xf32> to vector<256x16xf32>
    %cst_11 = arith.constant 5.000000e-01 : f32
    %15 = vector.broadcast %cst_11 : f32 to vector<256x16xf32>
    %16 = arith.mulf %15, %13 : vector<256x16xf32>
    %17 = math.exp %16 : vector<256x16xf32>
    %c0_12 = arith.constant 0 : index
    %c0_13 = arith.constant 0 : index
    %18 = vector.load %arg6[%c0_12, %c0_13] : memref<256x16xf32, #tpu.memory_space<vmem>>, vector<256x16xf32>
    %19 = arith.mulf %17, %18 : vector<256x16xf32>
    %20 = arith.addf %19, %14 : vector<256x16xf32>
    %c0_14 = arith.constant 0 : index
    %c0_15 = arith.constant 0 : index
    %21 = vector.load %arg7[%c0_14, %c0_15] : memref<256x16xf32, #tpu.memory_space<vmem>>, vector<256x16xf32>
    tpu.vector_store %arg7[%c0_14, %c0_15], %20 {strides = array<i32>} : memref<256x16xf32, #tpu.memory_space<vmem>>, vector<256x16xf32>,
    %c0_16 = arith.constant 0 : index
    %c0_17 = arith.constant 0 : index
    %22 = vector.load %arg8[%c0_16, %c0_17] : memref<256x16xf32, #tpu.memory_space<vmem>>, vector<256x16xf32>
    tpu.vector_store %arg8[%c0_16, %c0_17], %13 {strides = array<i32>} : memref<256x16xf32, #tpu.memory_space<vmem>>, vector<256x16xf32>,
    %c0_18 = arith.constant 0 : index
    %c0_19 = arith.constant 0 : index
    %23 = vector.load %arg9[%c0_18, %c0_19] : memref<256x16xf32, #tpu.memory_space<vmem>>, vector<256x16xf32>
    tpu.vector_store %arg9[%c0_18, %c0_19], %14 {strides = array<i32>} : memref<256x16xf32, #tpu.memory_space<vmem>>, vector<256x16xf32>,
    return
  }
  func.func @transform_0(%arg0: i32) -> (i32, i32) {
    %c0_i32 = arith.constant 0 : i32
    %c0_i32_0 = arith.constant 0 : i32
    return %arg0, %c0_i32 : i32, i32
  }
  func.func @transform_1(%arg0: i32) -> (i32, i32) {
    %c0_i32 = arith.constant 0 : i32
    %c0_i32_0 = arith.constant 0 : i32
    %c0_i32_1 = arith.constant 0 : i32
    return %c0_i32, %c0_i32_0 : i32, i32
  }
  func.func @transform_2(%arg0: i32) -> (i32, i32) {
    %c0_i32 = arith.constant 0 : i32
    %c0_i32_0 = arith.constant 0 : i32
    %c0_i32_1 = arith.constant 0 : i32
    return %c0_i32, %c0_i32_0 : i32, i32
  }
  func.func @transform_3(%arg0: i32) -> (i32, i32) {
    %c0_i32 = arith.constant 0 : i32
    %c0_i32_0 = arith.constant 0 : i32
    %c0_i32_1 = arith.constant 0 : i32
    return %c0_i32, %c0_i32_0 : i32, i32
  }
  func.func @transform_4(%arg0: i32) -> (i32, i32) {
    %c0_i32 = arith.constant 0 : i32
    %c0_i32_0 = arith.constant 0 : i32
    %c0_i32_1 = arith.constant 0 : i32
    return %c0_i32, %c0_i32_0 : i32, i32
  }
  func.func @transform_5(%arg0: i32) -> (i32, i32) {
    %c0_i32 = arith.constant 0 : i32
    %c0_i32_0 = arith.constant 0 : i32
    return %arg0, %c0_i32 : i32, i32
  }
  func.func @transform_6(%arg0: i32) -> (i32, i32) {
    %c0_i32 = arith.constant 0 : i32
    %c0_i32_0 = arith.constant 0 : i32
    return %arg0, %c0_i32 : i32, i32
  }
  func.func @transform_7(%arg0: i32) -> (i32, i32) {
    %c0_i32 = arith.constant 0 : i32
    %c0_i32_0 = arith.constant 0 : i32
    return %arg0, %c0_i32 : i32, i32
  }
  func.func @transform_8(%arg0: i32) -> (i32, i32) {
    %c0_i32 = arith.constant 0 : i32
    %c0_i32_0 = arith.constant 0 : i32
    return %arg0, %c0_i32 : i32, i32
  }
}

</mosaic_0001>

<llo_original>
// kernel: tpu_custom_call.1
$region0: #{tpu_custom_call.1}
  #allocation0 [shape = 'u32[]', space=smem, size = 0x4, offset = 0x4, fixed_abs, tag = 'smem constant byte address 0x4 - core index']
  #allocation1 [shape = 'u32[144,128]{1,0:T(1,128)}', space=vmem, size = 0x12000, scoped, tag = 'internal scratch']
  %s0 = inlined_call_operand.vmem [shape: f32[256,32], index: 0, kind: input, shape index: {}]
  %s1 = inlined_call_operand.vmem [shape: f32[32,32], index: 1, kind: input, shape index: {}]
  %s2 = inlined_call_operand.vmem [shape: f32[1,32], index: 2, kind: input, shape index: {}]
  %s3 = inlined_call_operand.vmem [shape: f32[32,32], index: 3, kind: input, shape index: {}]
  %s4 = inlined_call_operand.vmem [shape: f32[1,32], index: 4, kind: input, shape index: {}]
  %s5 = inlined_call_operand.vmem [shape: f32[256,16], index: 5, kind: input, shape index: {}]
  %s6 = inlined_call_operand.vmem [shape: f32[256,16], index: 6, kind: output, shape index: {0}]
  %s7 = inlined_call_operand.vmem [shape: f32[256,16], index: 7, kind: output, shape index: {1}]
  %s8 = inlined_call_operand.vmem [shape: f32[256,16], index: 8, kind: output, shape index: {2}]
  %9 = xla_tuple %s6, %s7, %s8
  %s10 = sld [smem:[#allocation0]]
  $region50: #{tpu_custom_call.1} parent=0
    _
  %s12 = ssub.s32 1, %s10
  %s13 = scalar_select 0, %s12, %s10
  // Predicated region
  $region2: #{tpu_custom_call.1} parent=0 // pred_check
    _
  $region3: #{tpu_custom_call.1} parent=0 // pred_check_branch
    %15 = sbr.rel (0) target = $region5
  $region4: #{tpu_custom_call.1} parent=0 // pred_region
    _
  $region5: #{tpu_custom_call.1} parent=0 // pred_fallthru
    _
  // Predicated region
  $region6: #{tpu_custom_call.1} parent=0 // pred_check
    _
  $region7: #{tpu_custom_call.1} parent=0 // pred_check_branch
    %17 = sbr.rel (0) target = $region9
  $region8: #{tpu_custom_call.1} parent=0 // pred_region
    _
  $region9: #{tpu_custom_call.1} parent=0 // pred_fallthru
    _
  // Predicated region
  $region10: #{tpu_custom_call.1} parent=0 // pred_check
    _
  $region11: #{tpu_custom_call.1} parent=0 // pred_check_branch
    %19 = sbr.rel (0) target = $region13
  $region12: #{tpu_custom_call.1} parent=0 // pred_region
    _
  $region13: #{tpu_custom_call.1} parent=0 // pred_fallthru
    _
  // Predicated region
  $region14: #{tpu_custom_call.1} parent=0 // pred_check
    _
  $region15: #{tpu_custom_call.1} parent=0 // pred_check_branch
    %21 = sbr.rel (0) target = $region17
  $region16: #{tpu_custom_call.1} parent=0 // pred_region
    _
  $region17: #{tpu_custom_call.1} parent=0 // pred_fallthru
    _
  // Predicated region
  $region18: #{tpu_custom_call.1} parent=0 // pred_check
    _
  $region19: #{tpu_custom_call.1} parent=0 // pred_check_branch
    %23 = sbr.rel (0) target = $region21
  $region20: #{tpu_custom_call.1} parent=0 // pred_region
    _
  $region21: #{tpu_custom_call.1} parent=0 // pred_fallthru
    _
  // Predicated region
  $region22: #{tpu_custom_call.1} parent=0 // pred_check
    _
  $region23: #{tpu_custom_call.1} parent=0 // pred_check_branch
    %25 = sbr.rel (0) target = $region25
  $region24: #{tpu_custom_call.1} parent=0 // pred_region
    _
  $region25: #{tpu_custom_call.1} parent=0 // pred_fallthru
    _
  %v26 = vld [vmem:[%s0] sm:$0xff]
  %v27 = vld [vmem:[%s0 + $0x8] sm:$0xff]
  %v28 = vld [vmem:[%s0 + $0x10] sm:$0xff]
  %v29 = vld [vmem:[%s0 + $0x18] sm:$0xff]
  %v30 = vld [vmem:[%s0 + $0x20] sm:$0xff]
  %v31 = vld [vmem:[%s0 + $0x28] sm:$0xff]
  %v32 = vld [vmem:[%s0 + $0x30] sm:$0xff]
  %v33 = vld [vmem:[%s0 + $0x38] sm:$0xff]
  %v34 = vld [vmem:[%s0 + $0x40] sm:$0xff]
  %v35 = vld [vmem:[%s0 + $0x48] sm:$0xff]
  %v36 = vld [vmem:[%s0 + $0x50] sm:$0xff]
  %v37 = vld [vmem:[%s0 + $0x58] sm:$0xff]
  %v38 = vld [vmem:[%s0 + $0x60] sm:$0xff]
  %v39 = vld [vmem:[%s0 + $0x68] sm:$0xff]
  %v40 = vld [vmem:[%s0 + $0x70] sm:$0xff]
  %v41 = vld [vmem:[%s0 + $0x78] sm:$0xff]
  %v42 = vld [vmem:[%s0 + $0x80] sm:$0xff]
  %v43 = vld [vmem:[%s0 + $0x88] sm:$0xff]
  %v44 = vld [vmem:[%s0 + $0x90] sm:$0xff]
  %v45 = vld [vmem:[%s0 + $0x98] sm:$0xff]
  %v46 = vld [vmem:[%s0 + $0xa0] sm:$0xff]
  %v47 = vld [vmem:[%s0 + $0xa8] sm:$0xff]
  %v48 = vld [vmem:[%s0 + $0xb0] sm:$0xff]
  %v49 = vld [vmem:[%s0 + $0xb8] sm:$0xff]
  %v50 = vld [vmem:[%s0 + $0xc0] sm:$0xff]
  %v51 = vld [vmem:[%s0 + $0xc8] sm:$0xff]
  %v52 = vld [vmem:[%s0 + $0xd0] sm:$0xff]
  %v53 = vld [vmem:[%s0 + $0xd8] sm:$0xff]
  %v54 = vld [vmem:[%s0 + $0xe0] sm:$0xff]
  %v55 = vld [vmem:[%s0 + $0xe8] sm:$0xff]
  %v56 = vld [vmem:[%s0 + $0xf0] sm:$0xff]
  %v57 = vld [vmem:[%s0 + $0xf8] sm:$0xff]
  %v58 = vld [vmem:[%s1] sm:$0xff]
  %v59 = vld [vmem:[%s1 + $0x8] sm:$0xff]
  %v60 = vld [vmem:[%s1 + $0x10] sm:$0xff]
  %v61 = vld [vmem:[%s1 + $0x18] sm:$0xff]
  %v62 = vld [vmem:[%s2] sm:$0x1]
  %v64 = vlaneseq
  %v65 = vshrl.u32 %v64, 7
  %v66 = vsub.s32 0, %v65
  %v67 = vrot.slane %v62, %v66
  %vm69 = vcmask 261120
  %v71 = vsel %vm69, %v26, 0
  %v74 = vsel %vm69, %v27, 0
  %v77 = vsel %vm69, %v28, 0
  %v80 = vsel %vm69, %v29, 0
  %v83 = vsel %vm69, %v30, 0
  %v86 = vsel %vm69, %v31, 0
  %v89 = vsel %vm69, %v32, 0
  %v92 = vsel %vm69, %v33, 0
  %v95 = vsel %vm69, %v34, 0
  %v98 = vsel %vm69, %v35, 0
  %v101 = vsel %vm69, %v36, 0
  %v104 = vsel %vm69, %v37, 0
  %v107 = vsel %vm69, %v38, 0
  %v110 = vsel %vm69, %v39, 0
  %v113 = vsel %vm69, %v40, 0
  %v116 = vsel %vm69, %v41, 0
  %v119 = vsel %vm69, %v42, 0
  %v122 = vsel %vm69, %v43, 0
  %v125 = vsel %vm69, %v44, 0
  %v128 = vsel %vm69, %v45, 0
  %v131 = vsel %vm69, %v46, 0
  %v134 = vsel %vm69, %v47, 0
  %v137 = vsel %vm69, %v48, 0
  %v140 = vsel %vm69, %v49, 0
  %v143 = vsel %vm69, %v50, 0
  %v146 = vsel %vm69, %v51, 0
  %v149 = vsel %vm69, %v52, 0
  %v152 = vsel %vm69, %v53, 0
  %v155 = vsel %vm69, %v54, 0
  %v158 = vsel %vm69, %v55, 0
  %v161 = vsel %vm69, %v56, 0
  %v164 = vsel %vm69, %v57, 0
  %166 = vmatprep.subr.mxu0 0.0
  %167 = vmatpush1.msra.mxu0 %v58
  %168 = vmatprep.subr.mxu0 0.0
  %169 = vmatpush1.msra.mxu0 %v59
  %170 = vmatprep.subr.mxu0 0.0
  %171 = vmatpush1.msra.mxu0 %v60
  %172 = vmatprep.subr.mxu0 0.0
  %173 = vmatpush1.msra.mxu0 %v61
  %174 = vmatprep.subr.mxu0 0.0
  %175 = vmatpush1.msra.mxu0 0.0
  %176 = vmatprep.subr.mxu0 0.0
  %177 = vmatpush1.msra.mxu0 0.0
  %178 = vmatprep.subr.mxu0 0.0
  %179 = vmatpush1.msra.mxu0 0.0
  %180 = vmatprep.subr.mxu0 0.0
  %181 = vmatpush1.msra.mxu0 0.0
  %182 = vmatprep.subr.mxu0 0.0
  %183 = vmatpush1.msra.mxu0 0.0
  %184 = vmatprep.subr.mxu0 0.0
  %185 = vmatpush1.msra.mxu0 0.0
  %186 = vmatprep.subr.mxu0 0.0
  %187 = vmatpush1.msra.mxu0 0.0
  %188 = vmatprep.subr.mxu0 0.0
  %189 = vmatpush1.msra.mxu0 0.0
  %190 = vmatprep.subr.mxu0 0.0
  %191 = vmatpush1.msra.mxu0 0.0
  %192 = vmatprep.subr.mxu0 0.0
  %193 = vmatpush1.msra.mxu0 0.0
  %194 = vmatprep.subr.mxu0 0.0
  %195 = vmatpush1.msra.mxu0 0.0
  %196 = vmatprep.subr.mxu0 0.0
  %197 = vmatpush1.msra.mxu0 0.0
  %198 = vmatprep.subr.mxu0 0.0
  %199 = vmatpush1.msra.mxu0 0.0
  %200 = vmatprep.subr.mxu0 0.0
  %201 = vmatpush1.msra.mxu0 0.0
  %202 = vmatprep.subr.mxu0 0.0
  %203 = vmatpush1.msra.mxu0 0.0
  %204 = vmatprep.subr.mxu0 0.0
  %205 = vmatpush1.msra.mxu0 0.0
  %206 = vmatprep.subr.mxu0 0.0
  %207 = vmatpush1.msra.mxu0 0.0
  %208 = vmatprep.subr.mxu0 0.0
  %209 = vmatpush1.msra.mxu0 0.0
  %210 = vmatprep.subr.mxu0 0.0
  %211 = vmatpush1.msra.mxu0 0.0
  %212 = vmatprep.subr.mxu0 0.0
  %213 = vmatpush1.msra.mxu0 0.0
  %214 = vmatprep.subr.mxu0 0.0
  %215 = vmatpush1.msra.mxu0 0.0
  %216 = vmatprep.subr.mxu0 0.0
  %217 = vmatpush1.msra.mxu0 0.0
  %218 = vmatprep.subr.mxu0 0.0
  %219 = vmatpush1.msra.mxu0 0.0
  %220 = vmatprep.subr.mxu0 0.0
  %221 = vmatpush1.msra.mxu0 0.0
  %222 = vmatprep.subr.mxu0 0.0
  %223 = vmatpush1.msra.mxu0 0.0
  %224 = vmatprep.subr.mxu0 0.0
  %225 = vmatpush1.msra.mxu0 0.0
  %226 = vmatprep.subr.mxu0 0.0
  %227 = vmatpush1.msra.mxu0 0.0
  %228 = vmatprep.subr.mxu0 0.0
  %229 = vmatpush1.msra.mxu0 0.0
  %230 = vmatprep.mubr.f32.mxu0 0.0
  %231 = vmatmul.mubr.f32.gmra.mrb[0].mxu0 %v71
  %v232 = vpop.f32.mrb[0].mxu0
  %v233 = vadd.f32 %v67, %v232
  %v234 = vpop.f32.mrb[0].mxu0
  %235 = vmatprep.mubr.f32.mxu0 0.0
  %236 = vmatmul.mubr.f32.gmra.mrb[0].mxu0 %v74
  %v237 = vpop.f32.mrb[0].mxu0
  %v238 = vadd.f32 %v67, %v237
  %v239 = vpop.f32.mrb[0].mxu0
  %240 = vmatprep.mubr.f32.mxu0 0.0
  %241 = vmatmul.mubr.f32.gmra.mrb[0].mxu0 %v77
  %v242 = vpop.f32.mrb[0].mxu0
  %v243 = vadd.f32 %v67, %v242
  %v244 = vpop.f32.mrb[0].mxu0
  %245 = vmatprep.mubr.f32.mxu0 0.0
  %246 = vmatmul.mubr.f32.gmra.mrb[0].mxu0 %v80
  %v247 = vpop.f32.mrb[0].mxu0
  %v248 = vadd.f32 %v67, %v247
  %v249 = vpop.f32.mrb[0].mxu0
  %250 = vmatprep.mubr.f32.mxu0 0.0
  %251 = vmatmul.mubr.f32.gmra.mrb[0].mxu0 %v83
  %v252 = vpop.f32.mrb[0].mxu0
  %v253 = vadd.f32 %v67, %v252
  %v254 = vpop.f32.mrb[0].mxu0
  %255 = vmatprep.mubr.f32.mxu0 0.0
  %256 = vmatmul.mubr.f32.gmra.mrb[0].mxu0 %v86
  %v257 = vpop.f32.mrb[0].mxu0
  %v258 = vadd.f32 %v67, %v257
  %v259 = vpop.f32.mrb[0].mxu0
  %260 = vmatprep.mubr.f32.mxu0 0.0
  %261 = vmatmul.mubr.f32.gmra.mrb[0].mxu0 %v89
  %v262 = vpop.f32.mrb[0].mxu0
  %v263 = vadd.f32 %v67, %v262
  %v264 = vpop.f32.mrb[0].mxu0
  %265 = vmatprep.mubr.f32.mxu0 0.0
  %266 = vmatmul.mubr.f32.gmra.mrb[0].mxu0 %v92
  %v267 = vpop.f32.mrb[0].mxu0
  %v268 = vadd.f32 %v67, %v267
  %v269 = vpop.f32.mrb[0].mxu0
  %270 = vmatprep.mubr.f32.mxu0 0.0
  %271 = vmatmul.mubr.f32.gmra.mrb[0].mxu0 %v95
  %v272 = vpop.f32.mrb[0].mxu0
  %v273 = vadd.f32 %v67, %v272
  %v274 = vpop.f32.mrb[0].mxu0
  %275 = vmatprep.mubr.f32.mxu0 0.0
  %276 = vmatmul.mubr.f32.gmra.mrb[0].mxu0 %v98
  %v277 = vpop.f32.mrb[0].mxu0
  %v278 = vadd.f32 %v67, %v277
  %v279 = vpop.f32.mrb[0].mxu0
  %280 = vmatprep.mubr.f32.mxu0 0.0
  %281 = vmatmul.mubr.f32.gmra.mrb[0].mxu0 %v101
  %v282 = vpop.f32.mrb[0].mxu0
  %v283 = vadd.f32 %v67, %v282
  %v284 = vpop.f32.mrb[0].mxu0
  %285 = vmatprep.mubr.f32.mxu0 0.0
  %286 = vmatmul.mubr.f32.gmra.mrb[0].mxu0 %v104
  %v287 = vpop.f32.mrb[0].mxu0
  %v288 = vadd.f32 %v67, %v287
  %v289 = vpop.f32.mrb[0].mxu0
  %290 = vmatprep.mubr.f32.mxu0 0.0
  %291 = vmatmul.mubr.f32.gmra.mrb[0].mxu0 %v107
  %v292 = vpop.f32.mrb[0].mxu0
  %v293 = vadd.f32 %v67, %v292
  %v294 = vpop.f32.mrb[0].mxu0
  %295 = vmatprep.mubr.f32.mxu0 0.0
  %296 = vmatmul.mubr.f32.gmra.mrb[0].mxu0 %v110
  %v297 = vpop.f32.mrb[0].mxu0
  %v298 = vadd.f32 %v67, %v297
  %v299 = vpop.f32.mrb[0].mxu0
  %300 = vmatprep.mubr.f32.mxu0 0.0
  %301 = vmatmul.mubr.f32.gmra.mrb[0].mxu0 %v113
  %v302 = vpop.f32.mrb[0].mxu0
  %v303 = vadd.f32 %v67, %v302
  %v304 = vpop.f32.mrb[0].mxu0
  %305 = vmatprep.mubr.f32.mxu0 0.0
  %306 = vmatmul.mubr.f32.gmra.mrb[0].mxu0 %v116
  %v307 = vpop.f32.mrb[0].mxu0
  %v308 = vadd.f32 %v67, %v307
  %v309 = vpop.f32.mrb[0].mxu0
  %310 = vmatprep.mubr.f32.mxu0 0.0
  %311 = vmatmul.mubr.f32.gmra.mrb[0].mxu0 %v119
  %v312 = vpop.f32.mrb[0].mxu0
  %v313 = vadd.f32 %v67, %v312
  %v314 = vpop.f32.mrb[0].mxu0
  %315 = vmatprep.mubr.f32.mxu0 0.0
  %316 = vmatmul.mubr.f32.gmra.mrb[0].mxu0 %v122
  %v317 = vpop.f32.mrb[0].mxu0
  %v318 = vadd.f32 %v67, %v317
  %v319 = vpop.f32.mrb[0].mxu0
  %320 = vmatprep.mubr.f32.mxu0 0.0
  %321 = vmatmul.mubr.f32.gmra.mrb[0].mxu0 %v125
  %v322 = vpop.f32.mrb[0].mxu0
  %v323 = vadd.f32 %v67, %v322
  %v324 = vpop.f32.mrb[0].mxu0
  %325 = vmatprep.mubr.f32.mxu0 0.0
  %326 = vmatmul.mubr.f32.gmra.mrb[0].mxu0 %v128
  %v327 = vpop.f32.mrb[0].mxu0
  %v328 = vadd.f32 %v67, %v327
  %v329 = vpop.f32.mrb[0].mxu0
  %330 = vmatprep.mubr.f32.mxu0 0.0
  %331 = vmatmul.mubr.f32.gmra.mrb[0].mxu0 %v131
  %v332 = vpop.f32.mrb[0].mxu0
  %v333 = vadd.f32 %v67, %v332
  %v334 = vpop.f32.mrb[0].mxu0
  %335 = vmatprep.mubr.f32.mxu0 0.0
  %336 = vmatmul.mubr.f32.gmra.mrb[0].mxu0 %v134
  %v337 = vpop.f32.mrb[0].mxu0
  %v338 = vadd.f32 %v67, %v337
  %v339 = vpop.f32.mrb[0].mxu0
  %340 = vmatprep.mubr.f32.mxu0 0.0
  %341 = vmatmul.mubr.f32.gmra.mrb[0].mxu0 %v137
  %v342 = vpop.f32.mrb[0].mxu0
  %v343 = vadd.f32 %v67, %v342
  %v344 = vpop.f32.mrb[0].mxu0
  %345 = vmatprep.mubr.f32.mxu0 0.0
  %346 = vmatmul.mubr.f32.gmra.mrb[0].mxu0 %v140
  %v347 = vpop.f32.mrb[0].mxu0
  %v348 = vadd.f32 %v67, %v347
  %v349 = vpop.f32.mrb[0].mxu0
  %350 = vmatprep.mubr.f32.mxu0 0.0
  %351 = vmatmul.mubr.f32.gmra.mrb[0].mxu0 %v143
  %v352 = vpop.f32.mrb[0].mxu0
  %v353 = vadd.f32 %v67, %v352
  %v354 = vpop.f32.mrb[0].mxu0
  %355 = vmatprep.mubr.f32.mxu0 0.0
  %356 = vmatmul.mubr.f32.gmra.mrb[0].mxu0 %v146
  %v357 = vpop.f32.mrb[0].mxu0
  %v358 = vadd.f32 %v67, %v357
  %v359 = vpop.f32.mrb[0].mxu0
  %360 = vmatprep.mubr.f32.mxu0 0.0
  %361 = vmatmul.mubr.f32.gmra.mrb[0].mxu0 %v149
  %v362 = vpop.f32.mrb[0].mxu0
  %v363 = vadd.f32 %v67, %v362
  %v364 = vpop.f32.mrb[0].mxu0
  %365 = vmatprep.mubr.f32.mxu0 0.0
  %366 = vmatmul.mubr.f32.gmra.mrb[0].mxu0 %v152
  %v367 = vpop.f32.mrb[0].mxu0
  %v368 = vadd.f32 %v67, %v367
  %v369 = vpop.f32.mrb[0].mxu0
  %370 = vmatprep.mubr.f32.mxu0 0.0
  %371 = vmatmul.mubr.f32.gmra.mrb[0].mxu0 %v155
  %v372 = vpop.f32.mrb[0].mxu0
  %v373 = vadd.f32 %v67, %v372
  %v374 = vpop.f32.mrb[0].mxu0
  %375 = vmatprep.mubr.f32.mxu0 0.0
  %376 = vmatmul.mubr.f32.gmra.mrb[0].mxu0 %v158
  %v377 = vpop.f32.mrb[0].mxu0
  %v378 = vadd.f32 %v67, %v377
  %v379 = vpop.f32.mrb[0].mxu0
  %380 = vmatprep.mubr.f32.mxu0 0.0
  %381 = vmatmul.mubr.f32.gmra.mrb[0].mxu0 %v161
  %v382 = vpop.f32.mrb[0].mxu0
  %v383 = vadd.f32 %v67, %v382
  %v384 = vpop.f32.mrb[0].mxu0
  %385 = vmatprep.mubr.f32.mxu0 0.0
  %386 = vmatmul.mubr.f32.gmra.mrb[0].mxu0 %v164
  %v387 = vpop.f32.mrb[0].mxu0
  %v388 = vadd.f32 %v67, %v387
  %v389 = vpop.f32.mrb[0].mxu0
  %390 = vdwg.mxu0
  %v391 = vmax.f32 %v233, 0.0
  %v392 = vmax.f32 %v238, 0.0
  %v393 = vmax.f32 %v243, 0.0
  %v394 = vmax.f32 %v248, 0.0
  %v395 = vmax.f32 %v253, 0.0
  %v396 = vmax.f32 %v258, 0.0
  %v397 = vmax.f32 %v263, 0.0
  %v398 = vmax.f32 %v268, 0.0
  %v399 = vmax.f32 %v273, 0.0
  %v400 = vmax.f32 %v278, 0.0
  %v401 = vmax.f32 %v283, 0.0
  %v402 = vmax.f32 %v288, 0.0
  %v403 = vmax.f32 %v293, 0.0
  %v404 = vmax.f32 %v298, 0.0
  %v405 = vmax.f32 %v303, 0.0
  %v406 = vmax.f32 %v308, 0.0
  %v407 = vmax.f32 %v313, 0.0
  %v408 = vmax.f32 %v318, 0.0
  %v409 = vmax.f32 %v323, 0.0
  %v410 = vmax.f32 %v328, 0.0
  %v411 = vmax.f32 %v333, 0.0
  %v412 = vmax.f32 %v338, 0.0
  %v413 = vmax.f32 %v343, 0.0
  %v414 = vmax.f32 %v348, 0.0
  %v415 = vmax.f32 %v353, 0.0
  %v416 = vmax.f32 %v358, 0.0
  %v417 = vmax.f32 %v363, 0.0
  %v418 = vmax.f32 %v368, 0.0
  %v419 = vmax.f32 %v373, 0.0
  %v420 = vmax.f32 %v378, 0.0
  %v421 = vmax.f32 %v383, 0.0
  %v422 = vmax.f32 %v388, 0.0
  %v423 = vld [vmem:[%s3] sm:$0xff]
  %v424 = vld [vmem:[%s3 + $0x8] sm:$0xff]
  %v425 = vld [vmem:[%s3 + $0x10] sm:$0xff]
  %v426 = vld [vmem:[%s3 + $0x18] sm:$0xff]
  %v427 = vld [vmem:[%s4] sm:$0x1]
  %v429 = vlaneseq
  %v430 = vshrl.u32 %v429, 7
  %v431 = vsub.s32 0, %v430
  %v432 = vrot.slane %v427, %v431
  %v435 = vsel %vm69, %v391, 0
  %v438 = vsel %vm69, %v392, 0
  %v441 = vsel %vm69, %v393, 0
  %v444 = vsel %vm69, %v394, 0
  %v447 = vsel %vm69, %v395, 0
  %v450 = vsel %vm69, %v396, 0
  %v453 = vsel %vm69, %v397, 0
  %v456 = vsel %vm69, %v398, 0
  %v459 = vsel %vm69, %v399, 0
  %v462 = vsel %vm69, %v400, 0
  %v465 = vsel %vm69, %v401, 0
  %v468 = vsel %vm69, %v402, 0
  %v471 = vsel %vm69, %v403, 0
  %v474 = vsel %vm69, %v404, 0
  %v477 = vsel %vm69, %v405, 0
  %v480 = vsel %vm69, %v406, 0
  %v483 = vsel %vm69, %v407, 0
  %v486 = vsel %vm69, %v408, 0
  %v489 = vsel %vm69, %v409, 0
  %v492 = vsel %vm69, %v410, 0
  %v495 = vsel %vm69, %v411, 0
  %v498 = vsel %vm69, %v412, 0
  %v501 = vsel %vm69, %v413, 0
  %v504 = vsel %vm69, %v414, 0
  %v507 = vsel %vm69, %v415, 0
  %v510 = vsel %vm69, %v416, 0
  %v513 = vsel %vm69, %v417, 0
  %v516 = vsel %vm69, %v418, 0
  %v519 = vsel %vm69, %v419, 0
  %v522 = vsel %vm69, %v420, 0
  %v525 = vsel %vm69, %v421, 0
  %v528 = vsel %vm69, %v422, 0
  %530 = vmatprep.subr.mxu0 0.0
  %531 = vmatpush1.msra.mxu0 %v423
  %532 = vmatprep.subr.mxu0 0.0
  %533 = vmatpush1.msra.mxu0 %v424
  %534 = vmatprep.subr.mxu0 0.0
  %535 = vmatpush1.msra.mxu0 %v425
  %536 = vmatprep.subr.mxu0 0.0
  %537 = vmatpush1.msra.mxu0 %v426
  %538 = vmatprep.subr.mxu0 0.0
  %539 = vmatpush1.msra.mxu0 0.0
  %540 = vmatprep.subr.mxu0 0.0
  %541 = vmatpush1.msra.mxu0 0.0
  %542 = vmatprep.subr.mxu0 0.0
  %543 = vmatpush1.msra.mxu0 0.0
  %544 = vmatprep.subr.mxu0 0.0
  %545 = vmatpush1.msra.mxu0 0.0
  %546 = vmatprep.subr.mxu0 0.0
  %547 = vmatpush1.msra.mxu0 0.0
  %548 = vmatprep.subr.mxu0 0.0
  %549 = vmatpush1.msra.mxu0 0.0
  %550 = vmatprep.subr.mxu0 0.0
  %551 = vmatpush1.msra.mxu0 0.0
  %552 = vmatprep.subr.mxu0 0.0
  %553 = vmatpush1.msra.mxu0 0.0
  %554 = vmatprep.subr.mxu0 0.0
  %555 = vmatpush1.msra.mxu0 0.0
  %556 = vmatprep.subr.mxu0 0.0
  %557 = vmatpush1.msra.mxu0 0.0
  %558 = vmatprep.subr.mxu0 0.0
  %559 = vmatpush1.msra.mxu0 0.0
  %560 = vmatprep.subr.mxu0 0.0
  %561 = vmatpush1.msra.mxu0 0.0
  %562 = vmatprep.subr.mxu0 0.0
  %563 = vmatpush1.msra.mxu0 0.0
  %564 = vmatprep.subr.mxu0 0.0
  %565 = vmatpush1.msra.mxu0 0.0
  %566 = vmatprep.subr.mxu0 0.0
  %567 = vmatpush1.msra.mxu0 0.0
  %568 = vmatprep.subr.mxu0 0.0
  %569 = vmatpush1.msra.mxu0 0.0
  %570 = vmatprep.subr.mxu0 0.0
  %571 = vmatpush1.msra.mxu0 0.0
  %572 = vmatprep.subr.mxu0 0.0
  %573 = vmatpush1.msra.mxu0 0.0
  %574 = vmatprep.subr.mxu0 0.0
  %575 = vmatpush1.msra.mxu0 0.0
  %576 = vmatprep.subr.mxu0 0.0
  %577 = vmatpush1.msra.mxu0 0.0
  %578 = vmatprep.subr.mxu0 0.0
  %579 = vmatpush1.msra.mxu0 0.0
  %580 = vmatprep.subr.mxu0 0.0
  %581 = vmatpush1.msra.mxu0 0.0
  %582 = vmatprep.subr.mxu0 0.0
  %583 = vmatpush1.msra.mxu0 0.0
  %584 = vmatprep.subr.mxu0 0.0
  %585 = vmatpush1.msra.mxu0 0.0
  %586 = vmatprep.subr.mxu0 0.0
  %587 = vmatpush1.msra.mxu0 0.0
  %588 = vmatprep.subr.mxu0 0.0
  %589 = vmatpush1.msra.mxu0 0.0
  %590 = vmatprep.subr.mxu0 0.0
  %591 = vmatpush1.msra.mxu0 0.0
  %592 = vmatprep.subr.mxu0 0.0
  %593 = vmatpush1.msra.mxu0 0.0
  %594 = vmatprep.mubr.f32.mxu0 0.0
  %595 = vmatmul.mubr.f32.gmra.mrb[0].mxu0 %v435
  %v596 = vpop.f32.mrb[0].mxu0
  %v597 = vadd.f32 %v432, %v596
  %v598 = vpop.f32.mrb[0].mxu0
  %599 = vmatprep.mubr.f32.mxu0 0.0
  %600 = vmatmul.mubr.f32.gmra.mrb[0].mxu0 %v438
  %v601 = vpop.f32.mrb[0].mxu0
  %v602 = vadd.f32 %v432, %v601
  %v603 = vpop.f32.mrb[0].mxu0
  %604 = vmatprep.mubr.f32.mxu0 0.0
  %605 = vmatmul.mubr.f32.gmra.mrb[0].mxu0 %v441
  %v606 = vpop.f32.mrb[0].mxu0
  %v607 = vadd.f32 %v432, %v606
  %v608 = vpop.f32.mrb[0].mxu0
  %609 = vmatprep.mubr.f32.mxu0 0.0
  %610 = vmatmul.mubr.f32.gmra.mrb[0].mxu0 %v444
  %v611 = vpop.f32.mrb[0].mxu0
  %v612 = vadd.f32 %v432, %v611
  %v613 = vpop.f32.mrb[0].mxu0
  %614 = vmatprep.mubr.f32.mxu0 0.0
  %615 = vmatmul.mubr.f32.gmra.mrb[0].mxu0 %v447
  %v616 = vpop.f32.mrb[0].mxu0
  %v617 = vadd.f32 %v432, %v616
  %v618 = vpop.f32.mrb[0].mxu0
  %619 = vmatprep.mubr.f32.mxu0 0.0
  %620 = vmatmul.mubr.f32.gmra.mrb[0].mxu0 %v450
  %v621 = vpop.f32.mrb[0].mxu0
  %v622 = vadd.f32 %v432, %v621
  %v623 = vpop.f32.mrb[0].mxu0
  %624 = vmatprep.mubr.f32.mxu0 0.0
  %625 = vmatmul.mubr.f32.gmra.mrb[0].mxu0 %v453
  %v626 = vpop.f32.mrb[0].mxu0
  %v627 = vadd.f32 %v432, %v626
  %v628 = vpop.f32.mrb[0].mxu0
  %629 = vmatprep.mubr.f32.mxu0 0.0
  %630 = vmatmul.mubr.f32.gmra.mrb[0].mxu0 %v456
  %v631 = vpop.f32.mrb[0].mxu0
  %v632 = vadd.f32 %v432, %v631
  %v633 = vpop.f32.mrb[0].mxu0
  %634 = vmatprep.mubr.f32.mxu0 0.0
  %635 = vmatmul.mubr.f32.gmra.mrb[0].mxu0 %v459
  %v636 = vpop.f32.mrb[0].mxu0
  %v637 = vadd.f32 %v432, %v636
  %v638 = vpop.f32.mrb[0].mxu0
  %639 = vmatprep.mubr.f32.mxu0 0.0
  %640 = vmatmul.mubr.f32.gmra.mrb[0].mxu0 %v462
  %v641 = vpop.f32.mrb[0].mxu0
  %v642 = vadd.f32 %v432, %v641
  %v643 = vpop.f32.mrb[0].mxu0
  %644 = vmatprep.mubr.f32.mxu0 0.0
  %645 = vmatmul.mubr.f32.gmra.mrb[0].mxu0 %v465
  %v646 = vpop.f32.mrb[0].mxu0
  %v647 = vadd.f32 %v432, %v646
  %v648 = vpop.f32.mrb[0].mxu0
  %649 = vmatprep.mubr.f32.mxu0 0.0
  %650 = vmatmul.mubr.f32.gmra.mrb[0].mxu0 %v468
  %v651 = vpop.f32.mrb[0].mxu0
  %v652 = vadd.f32 %v432, %v651
  %v653 = vpop.f32.mrb[0].mxu0
  %654 = vmatprep.mubr.f32.mxu0 0.0
  %655 = vmatmul.mubr.f32.gmra.mrb[0].mxu0 %v471
  %v656 = vpop.f32.mrb[0].mxu0
  %v657 = vadd.f32 %v432, %v656
  %v658 = vpop.f32.mrb[0].mxu0
  %659 = vmatprep.mubr.f32.mxu0 0.0
  %660 = vmatmul.mubr.f32.gmra.mrb[0].mxu0 %v474
  %v661 = vpop.f32.mrb[0].mxu0
  %v662 = vadd.f32 %v432, %v661
  %v663 = vpop.f32.mrb[0].mxu0
  %664 = vmatprep.mubr.f32.mxu0 0.0
  %665 = vmatmul.mubr.f32.gmra.mrb[0].mxu0 %v477
  %v666 = vpop.f32.mrb[0].mxu0
  %v667 = vadd.f32 %v432, %v666
  %v668 = vpop.f32.mrb[0].mxu0
  %669 = vmatprep.mubr.f32.mxu0 0.0
  %670 = vmatmul.mubr.f32.gmra.mrb[0].mxu0 %v480
  %v671 = vpop.f32.mrb[0].mxu0
  %v672 = vadd.f32 %v432, %v671
  %v673 = vpop.f32.mrb[0].mxu0
  %674 = vmatprep.mubr.f32.mxu0 0.0
  %675 = vmatmul.mubr.f32.gmra.mrb[0].mxu0 %v483
  %v676 = vpop.f32.mrb[0].mxu0
  %v677 = vadd.f32 %v432, %v676
  %v678 = vpop.f32.mrb[0].mxu0
  %679 = vmatprep.mubr.f32.mxu0 0.0
  %680 = vmatmul.mubr.f32.gmra.mrb[0].mxu0 %v486
  %v681 = vpop.f32.mrb[0].mxu0
  %v682 = vadd.f32 %v432, %v681
  %v683 = vpop.f32.mrb[0].mxu0
  %684 = vmatprep.mubr.f32.mxu0 0.0
  %685 = vmatmul.mubr.f32.gmra.mrb[0].mxu0 %v489
  %v686 = vpop.f32.mrb[0].mxu0
  %v687 = vadd.f32 %v432, %v686
  %v688 = vpop.f32.mrb[0].mxu0
  %689 = vmatprep.mubr.f32.mxu0 0.0
  %690 = vmatmul.mubr.f32.gmra.mrb[0].mxu0 %v492
  %v691 = vpop.f32.mrb[0].mxu0
  %v692 = vadd.f32 %v432, %v691
  %v693 = vpop.f32.mrb[0].mxu0
  %694 = vmatprep.mubr.f32.mxu0 0.0
  %695 = vmatmul.mubr.f32.gmra.mrb[0].mxu0 %v495
  %v696 = vpop.f32.mrb[0].mxu0
  %v697 = vadd.f32 %v432, %v696
  %v698 = vpop.f32.mrb[0].mxu0
  %699 = vmatprep.mubr.f32.mxu0 0.0
  %700 = vmatmul.mubr.f32.gmra.mrb[0].mxu0 %v498
  %v701 = vpop.f32.mrb[0].mxu0
  %v702 = vadd.f32 %v432, %v701
  %v703 = vpop.f32.mrb[0].mxu0
  %704 = vmatprep.mubr.f32.mxu0 0.0
  %705 = vmatmul.mubr.f32.gmra.mrb[0].mxu0 %v501
  %v706 = vpop.f32.mrb[0].mxu0
  %v707 = vadd.f32 %v432, %v706
  %v708 = vpop.f32.mrb[0].mxu0
  %709 = vmatprep.mubr.f32.mxu0 0.0
  %710 = vmatmul.mubr.f32.gmra.mrb[0].mxu0 %v504
  %v711 = vpop.f32.mrb[0].mxu0
  %v712 = vadd.f32 %v432, %v711
  %v713 = vpop.f32.mrb[0].mxu0
  %714 = vmatprep.mubr.f32.mxu0 0.0
  %715 = vmatmul.mubr.f32.gmra.mrb[0].mxu0 %v507
  %v716 = vpop.f32.mrb[0].mxu0
  %v717 = vadd.f32 %v432, %v716
  %v718 = vpop.f32.mrb[0].mxu0
  %719 = vmatprep.mubr.f32.mxu0 0.0
  %720 = vmatmul.mubr.f32.gmra.mrb[0].mxu0 %v510
  %v721 = vpop.f32.mrb[0].mxu0
  %v722 = vadd.f32 %v432, %v721
  %v723 = vpop.f32.mrb[0].mxu0
  %724 = vmatprep.mubr.f32.mxu0 0.0
  %725 = vmatmul.mubr.f32.gmra.mrb[0].mxu0 %v513
  %v726 = vpop.f32.mrb[0].mxu0
  %v727 = vadd.f32 %v432, %v726
  %v728 = vpop.f32.mrb[0].mxu0
  %729 = vmatprep.mubr.f32.mxu0 0.0
  %730 = vmatmul.mubr.f32.gmra.mrb[0].mxu0 %v516
  %v731 = vpop.f32.mrb[0].mxu0
  %v732 = vadd.f32 %v432, %v731
  %v733 = vpop.f32.mrb[0].mxu0
  %734 = vmatprep.mubr.f32.mxu0 0.0
  %735 = vmatmul.mubr.f32.gmra.mrb[0].mxu0 %v519
  %v736 = vpop.f32.mrb[0].mxu0
  %v737 = vadd.f32 %v432, %v736
  %v738 = vpop.f32.mrb[0].mxu0
  %739 = vmatprep.mubr.f32.mxu0 0.0
  %740 = vmatmul.mubr.f32.gmra.mrb[0].mxu0 %v522
  %v741 = vpop.f32.mrb[0].mxu0
  %v742 = vadd.f32 %v432, %v741
  %v743 = vpop.f32.mrb[0].mxu0
  %744 = vmatprep.mubr.f32.mxu0 0.0
  %745 = vmatmul.mubr.f32.gmra.mrb[0].mxu0 %v525
  %v746 = vpop.f32.mrb[0].mxu0
  %v747 = vadd.f32 %v432, %v746
  %v748 = vpop.f32.mrb[0].mxu0
  %749 = vmatprep.mubr.f32.mxu0 0.0
  %750 = vmatmul.mubr.f32.gmra.mrb[0].mxu0 %v528
  %v751 = vpop.f32.mrb[0].mxu0
  %v752 = vadd.f32 %v432, %v751
  %v753 = vpop.f32.mrb[0].mxu0
  %754 = vdwg.mxu0
  %v755 = vmul.f32 %v597, 0.5
  %v756 = vmul.f32 %v602, 0.5
  %v757 = vmul.f32 %v607, 0.5
  %v758 = vmul.f32 %v612, 0.5
  %v759 = vmul.f32 %v617, 0.5
  %v760 = vmul.f32 %v622, 0.5
  %v761 = vmul.f32 %v627, 0.5
  %v762 = vmul.f32 %v632, 0.5
  %v763 = vmul.f32 %v637, 0.5
  %v764 = vmul.f32 %v642, 0.5
  %v765 = vmul.f32 %v647, 0.5
  %v766 = vmul.f32 %v652, 0.5
  %v767 = vmul.f32 %v657, 0.5
  %v768 = vmul.f32 %v662, 0.5
  %v769 = vmul.f32 %v667, 0.5
  %v770 = vmul.f32 %v672, 0.5
  %v771 = vmul.f32 %v677, 0.5
  %v772 = vmul.f32 %v682, 0.5
  %v773 = vmul.f32 %v687, 0.5
  %v774 = vmul.f32 %v692, 0.5
  %v775 = vmul.f32 %v697, 0.5
  %v776 = vmul.f32 %v702, 0.5
  %v777 = vmul.f32 %v707, 0.5
  %v778 = vmul.f32 %v712, 0.5
  %v779 = vmul.f32 %v717, 0.5
  %v780 = vmul.f32 %v722, 0.5
  %v781 = vmul.f32 %v727, 0.5
  %v782 = vmul.f32 %v732, 0.5
  %v783 = vmul.f32 %v737, 0.5
  %v784 = vmul.f32 %v742, 0.5
  %v785 = vmul.f32 %v747, 0.5
  %v786 = vmul.f32 %v752, 0.5
  %v787 = vmul.f32 %v755, 1.442695
  %v788 = vpow.pop %v787
  %v789 = vmul.f32 %v756, 1.442695
  %v790 = vpow.pop %v789
  %v791 = vmul.f32 %v757, 1.442695
  %v792 = vpow.pop %v791
  %v793 = vmul.f32 %v758, 1.442695
  %v794 = vpow.pop %v793
  %v795 = vmul.f32 %v759, 1.442695
  %v796 = vpow.pop %v795
  %v797 = vmul.f32 %v760, 1.442695
  %v798 = vpow.pop %v797
  %v799 = vmul.f32 %v761, 1.442695
  %v800 = vpow.pop %v799
  %v801 = vmul.f32 %v762, 1.442695
  %v802 = vpow.pop %v801
  %v803 = vmul.f32 %v763, 1.442695
  %v804 = vpow.pop %v803
  %v805 = vmul.f32 %v764, 1.442695
  %v806 = vpow.pop %v805
  %v807 = vmul.f32 %v765, 1.442695
  %v808 = vpow.pop %v807
  %v809 = vmul.f32 %v766, 1.442695
  %v810 = vpow.pop %v809
  %v811 = vmul.f32 %v767, 1.442695
  %v812 = vpow.pop %v811
  %v813 = vmul.f32 %v768, 1.442695
  %v814 = vpow.pop %v813
  %v815 = vmul.f32 %v769, 1.442695
  %v816 = vpow.pop %v815
  %v817 = vmul.f32 %v770, 1.442695
  %v818 = vpow.pop %v817
  %v819 = vmul.f32 %v771, 1.442695
  %v820 = vpow.pop %v819
  %v821 = vmul.f32 %v772, 1.442695
  %v822 = vpow.pop %v821
  %v823 = vmul.f32 %v773, 1.442695
  %v824 = vpow.pop %v823
  %v825 = vmul.f32 %v774, 1.442695
  %v826 = vpow.pop %v825
  %v827 = vmul.f32 %v775, 1.442695
  %v828 = vpow.pop %v827
  %v829 = vmul.f32 %v776, 1.442695
  %v830 = vpow.pop %v829
  %v831 = vmul.f32 %v777, 1.442695
  %v832 = vpow.pop %v831
  %v833 = vmul.f32 %v778, 1.442695
  %v834 = vpow.pop %v833
  %v835 = vmul.f32 %v779, 1.442695
  %v836 = vpow.pop %v835
  %v837 = vmul.f32 %v780, 1.442695
  %v838 = vpow.pop %v837
  %v839 = vmul.f32 %v781, 1.442695
  %v840 = vpow.pop %v839
  %v841 = vmul.f32 %v782, 1.442695
  %v842 = vpow.pop %v841
  %v843 = vmul.f32 %v783, 1.442695
  %v844 = vpow.pop %v843
  %v845 = vmul.f32 %v784, 1.442695
  %v846 = vpow.pop %v845
  %v847 = vmul.f32 %v785, 1.442695
  %v848 = vpow.pop %v847
  %v849 = vmul.f32 %v786, 1.442695
  %v850 = vpow.pop %v849
  %v851 = vld [vmem:[%s5] sm:$0xff]
  %v852 = vld [vmem:[%s5 + $0x8] sm:$0xff]
  %v853 = vld [vmem:[%s5 + $0x10] sm:$0xff]
  %v854 = vld [vmem:[%s5 + $0x18] sm:$0xff]
  %v855 = vld [vmem:[%s5 + $0x20] sm:$0xff]
  %v856 = vld [vmem:[%s5 + $0x28] sm:$0xff]
  %v857 = vld [vmem:[%s5 + $0x30] sm:$0xff]
  %v858 = vld [vmem:[%s5 + $0x38] sm:$0xff]
  %v859 = vld [vmem:[%s5 + $0x40] sm:$0xff]
  %v860 = vld [vmem:[%s5 + $0x48] sm:$0xff]
  %v861 = vld [vmem:[%s5 + $0x50] sm:$0xff]
  %v862 = vld [vmem:[%s5 + $0x58] sm:$0xff]
  %v863 = vld [vmem:[%s5 + $0x60] sm:$0xff]
  %v864 = vld [vmem:[%s5 + $0x68] sm:$0xff]
  %v865 = vld [vmem:[%s5 + $0x70] sm:$0xff]
  %v866 = vld [vmem:[%s5 + $0x78] sm:$0xff]
  %v867 = vld [vmem:[%s5 + $0x80] sm:$0xff]
  %v868 = vld [vmem:[%s5 + $0x88] sm:$0xff]
  %v869 = vld [vmem:[%s5 + $0x90] sm:$0xff]
  %v870 = vld [vmem:[%s5 + $0x98] sm:$0xff]
  %v871 = vld [vmem:[%s5 + $0xa0] sm:$0xff]
  %v872 = vld [vmem:[%s5 + $0xa8] sm:$0xff]
  %v873 = vld [vmem:[%s5 + $0xb0] sm:$0xff]
  %v874 = vld [vmem:[%s5 + $0xb8] sm:$0xff]
  %v875 = vld [vmem:[%s5 + $0xc0] sm:$0xff]
  %v876 = vld [vmem:[%s5 + $0xc8] sm:$0xff]
  %v877 = vld [vmem:[%s5 + $0xd0] sm:$0xff]
  %v878 = vld [vmem:[%s5 + $0xd8] sm:$0xff]
  %v879 = vld [vmem:[%s5 + $0xe0] sm:$0xff]
  %v880 = vld [vmem:[%s5 + $0xe8] sm:$0xff]
  %v881 = vld [vmem:[%s5 + $0xf0] sm:$0xff]
  %v882 = vld [vmem:[%s5 + $0xf8] sm:$0xff]
  %v883 = vmul.f32 %v788, %v851
  %v884 = vmul.f32 %v790, %v852
  %v885 = vmul.f32 %v792, %v853
  %v886 = vmul.f32 %v794, %v854
  %v887 = vmul.f32 %v796, %v855
  %v888 = vmul.f32 %v798, %v856
  %v889 = vmul.f32 %v800, %v857
  %v890 = vmul.f32 %v802, %v858
  %v891 = vmul.f32 %v804, %v859
  %v892 = vmul.f32 %v806, %v860
  %v893 = vmul.f32 %v808, %v861
  %v894 = vmul.f32 %v810, %v862
  %v895 = vmul.f32 %v812, %v863
  %v896 = vmul.f32 %v814, %v864
  %v897 = vmul.f32 %v816, %v865
  %v898 = vmul.f32 %v818, %v866
  %v899 = vmul.f32 %v820, %v867
  %v900 = vmul.f32 %v822, %v868
  %v901 = vmul.f32 %v824, %v869
  %v902 = vmul.f32 %v826, %v870
  %v903 = vmul.f32 %v828, %v871
  %v904 = vmul.f32 %v830, %v872
  %v905 = vmul.f32 %v832, %v873
  %v906 = vmul.f32 %v834, %v874
  %v907 = vmul.f32 %v836, %v875
  %v908 = vmul.f32 %v838, %v876
  %v909 = vmul.f32 %v840, %v877
  %v910 = vmul.f32 %v842, %v878
  %v911 = vmul.f32 %v844, %v879
  %v912 = vmul.f32 %v846, %v880
  %v913 = vmul.f32 %v848, %v881
  %v914 = vmul.f32 %v850, %v882
  %947 = vrot.lane.b32.xlu0 %v597, 112
  %v948 = vpop.permute.xlu0 %947
  %949 = vrot.lane.b32.xlu0 %v602, 112
  %v950 = vpop.permute.xlu0 %949
  %951 = vrot.lane.b32.xlu0 %v607, 112
  %v952 = vpop.permute.xlu0 %951
  %953 = vrot.lane.b32.xlu0 %v612, 112
  %v954 = vpop.permute.xlu0 %953
  %955 = vrot.lane.b32.xlu0 %v617, 112
  %v956 = vpop.permute.xlu0 %955
  %957 = vrot.lane.b32.xlu0 %v622, 112
  %v958 = vpop.permute.xlu0 %957
  %959 = vrot.lane.b32.xlu0 %v627, 112
  %v960 = vpop.permute.xlu0 %959
  %961 = vrot.lane.b32.xlu0 %v632, 112
  %v962 = vpop.permute.xlu0 %961
  %963 = vrot.lane.b32.xlu0 %v637, 112
  %v964 = vpop.permute.xlu0 %963
  %965 = vrot.lane.b32.xlu0 %v642, 112
  %v966 = vpop.permute.xlu0 %965
  %967 = vrot.lane.b32.xlu0 %v647, 112
  %v968 = vpop.permute.xlu0 %967
  %969 = vrot.lane.b32.xlu0 %v652, 112
  %v970 = vpop.permute.xlu0 %969
  %971 = vrot.lane.b32.xlu0 %v657, 112
  %v972 = vpop.permute.xlu0 %971
  %973 = vrot.lane.b32.xlu0 %v662, 112
  %v974 = vpop.permute.xlu0 %973
  %975 = vrot.lane.b32.xlu0 %v667, 112
  %v976 = vpop.permute.xlu0 %975
  %977 = vrot.lane.b32.xlu0 %v672, 112
  %v978 = vpop.permute.xlu0 %977
  %979 = vrot.lane.b32.xlu0 %v677, 112
  %v980 = vpop.permute.xlu0 %979
  %981 = vrot.lane.b32.xlu0 %v682, 112
  %v982 = vpop.permute.xlu0 %981
  %983 = vrot.lane.b32.xlu0 %v687, 112
  %v984 = vpop.permute.xlu0 %983
  %985 = vrot.lane.b32.xlu0 %v692, 112
  %v986 = vpop.permute.xlu0 %985
  %987 = vrot.lane.b32.xlu0 %v697, 112
  %v988 = vpop.permute.xlu0 %987
  %989 = vrot.lane.b32.xlu0 %v702, 112
  %v990 = vpop.permute.xlu0 %989
  %991 = vrot.lane.b32.xlu0 %v707, 112
  %v992 = vpop.permute.xlu0 %991
  %993 = vrot.lane.b32.xlu0 %v712, 112
  %v994 = vpop.permute.xlu0 %993
  %995 = vrot.lane.b32.xlu0 %v717, 112
  %v996 = vpop.permute.xlu0 %995
  %997 = vrot.lane.b32.xlu0 %v722, 112
  %v998 = vpop.permute.xlu0 %997
  %999 = vrot.lane.b32.xlu0 %v727, 112
  %v1000 = vpop.permute.xlu0 %999
  %1001 = vrot.lane.b32.xlu0 %v732, 112
  %v1002 = vpop.permute.xlu0 %1001
  %1003 = vrot.lane.b32.xlu0 %v737, 112
  %v1004 = vpop.permute.xlu0 %1003
  %1005 = vrot.lane.b32.xlu0 %v742, 112
  %v1006 = vpop.permute.xlu0 %1005
  %1007 = vrot.lane.b32.xlu0 %v747, 112
  %v1008 = vpop.permute.xlu0 %1007
  %1009 = vrot.lane.b32.xlu0 %v752, 112
  %v1010 = vpop.permute.xlu0 %1009
  %v1043 = vadd.f32 %v883, %v948
  %v1044 = vadd.f32 %v884, %v950
  %v1045 = vadd.f32 %v885, %v952
  %v1046 = vadd.f32 %v886, %v954
  %v1047 = vadd.f32 %v887, %v956
  %v1048 = vadd.f32 %v888, %v958
  %v1049 = vadd.f32 %v889, %v960
  %v1050 = vadd.f32 %v890, %v962
  %v1051 = vadd.f32 %v891, %v964
  %v1052 = vadd.f32 %v892, %v966
  %v1053 = vadd.f32 %v893, %v968
  %v1054 = vadd.f32 %v894, %v970
  %v1055 = vadd.f32 %v895, %v972
  %v1056 = vadd.f32 %v896, %v974
  %v1057 = vadd.f32 %v897, %v976
  %v1058 = vadd.f32 %v898, %v978
  %v1059 = vadd.f32 %v899, %v980
  %v1060 = vadd.f32 %v900, %v982
  %v1061 = vadd.f32 %v901, %v984
  %v1062 = vadd.f32 %v902, %v986
  %v1063 = vadd.f32 %v903, %v988
  %v1064 = vadd.f32 %v904, %v990
  %v1065 = vadd.f32 %v905, %v992
  %v1066 = vadd.f32 %v906, %v994
  %v1067 = vadd.f32 %v907, %v996
  %v1068 = vadd.f32 %v908, %v998
  %v1069 = vadd.f32 %v909, %v1000
  %v1070 = vadd.f32 %v910, %v1002
  %v1071 = vadd.f32 %v911, %v1004
  %v1072 = vadd.f32 %v912, %v1006
  %v1073 = vadd.f32 %v913, %v1008
  %v1074 = vadd.f32 %v914, %v1010
  %vm1075 = vcmask 130048
  %1076 = vst.msk [vmem:[%s6] sm:$0xff] %vm1075, %v1043
  %1077 = vst.msk [vmem:[%s6 + $0x8] sm:$0xff] %vm1075, %v1044
  %1078 = vst.msk [vmem:[%s6 + $0x10] sm:$0xff] %vm1075, %v1045
  %1079 = vst.msk [vmem:[%s6 + $0x18] sm:$0xff] %vm1075, %v1046
  %1080 = vst.msk [vmem:[%s6 + $0x20] sm:$0xff] %vm1075, %v1047
  %1081 = vst.msk [vmem:[%s6 + $0x28] sm:$0xff] %vm1075, %v1048
  %1082 = vst.msk [vmem:[%s6 + $0x30] sm:$0xff] %vm1075, %v1049
  %1083 = vst.msk [vmem:[%s6 + $0x38] sm:$0xff] %vm1075, %v1050
  %1084 = vst.msk [vmem:[%s6 + $0x40] sm:$0xff] %vm1075, %v1051
  %1085 = vst.msk [vmem:[%s6 + $0x48] sm:$0xff] %vm1075, %v1052
  %1086 = vst.msk [vmem:[%s6 + $0x50] sm:$0xff] %vm1075, %v1053
  %1087 = vst.msk [vmem:[%s6 + $0x58] sm:$0xff] %vm1075, %v1054
  %1088 = vst.msk [vmem:[%s6 + $0x60] sm:$0xff] %vm1075, %v1055
  %1089 = vst.msk [vmem:[%s6 + $0x68] sm:$0xff] %vm1075, %v1056
  %1090 = vst.msk [vmem:[%s6 + $0x70] sm:$0xff] %vm1075, %v1057
  %1091 = vst.msk [vmem:[%s6 + $0x78] sm:$0xff] %vm1075, %v1058
  %1092 = vst.msk [vmem:[%s6 + $0x80] sm:$0xff] %vm1075, %v1059
  %1093 = vst.msk [vmem:[%s6 + $0x88] sm:$0xff] %vm1075, %v1060
  %1094 = vst.msk [vmem:[%s6 + $0x90] sm:$0xff] %vm1075, %v1061
  %1095 = vst.msk [vmem:[%s6 + $0x98] sm:$0xff] %vm1075, %v1062
  %1096 = vst.msk [vmem:[%s6 + $0xa0] sm:$0xff] %vm1075, %v1063
  %1097 = vst.msk [vmem:[%s6 + $0xa8] sm:$0xff] %vm1075, %v1064
  %1098 = vst.msk [vmem:[%s6 + $0xb0] sm:$0xff] %vm1075, %v1065
  %1099 = vst.msk [vmem:[%s6 + $0xb8] sm:$0xff] %vm1075, %v1066
  %1100 = vst.msk [vmem:[%s6 + $0xc0] sm:$0xff] %vm1075, %v1067
  %1101 = vst.msk [vmem:[%s6 + $0xc8] sm:$0xff] %vm1075, %v1068
  %1102 = vst.msk [vmem:[%s6 + $0xd0] sm:$0xff] %vm1075, %v1069
  %1103 = vst.msk [vmem:[%s6 + $0xd8] sm:$0xff] %vm1075, %v1070
  %1104 = vst.msk [vmem:[%s6 + $0xe0] sm:$0xff] %vm1075, %v1071
  %1105 = vst.msk [vmem:[%s6 + $0xe8] sm:$0xff] %vm1075, %v1072
  %1106 = vst.msk [vmem:[%s6 + $0xf0] sm:$0xff] %vm1075, %v1073
  %1107 = vst.msk [vmem:[%s6 + $0xf8] sm:$0xff] %vm1075, %v1074
  %1108 = vst.msk [vmem:[%s7] sm:$0xff] %vm1075, %v597
  %1109 = vst.msk [vmem:[%s7 + $0x8] sm:$0xff] %vm1075, %v602
  %1110 = vst.msk [vmem:[%s7 + $0x10] sm:$0xff] %vm1075, %v607
  %1111 = vst.msk [vmem:[%s7 + $0x18] sm:$0xff] %vm1075, %v612
  %1112 = vst.msk [vmem:[%s7 + $0x20] sm:$0xff] %vm1075, %v617
  %1113 = vst.msk [vmem:[%s7 + $0x28] sm:$0xff] %vm1075, %v622
  %1114 = vst.msk [vmem:[%s7 + $0x30] sm:$0xff] %vm1075, %v627
  %1115 = vst.msk [vmem:[%s7 + $0x38] sm:$0xff] %vm1075, %v632
  %1116 = vst.msk [vmem:[%s7 + $0x40] sm:$0xff] %vm1075, %v637
  %1117 = vst.msk [vmem:[%s7 + $0x48] sm:$0xff] %vm1075, %v642
  %1118 = vst.msk [vmem:[%s7 + $0x50] sm:$0xff] %vm1075, %v647
  %1119 = vst.msk [vmem:[%s7 + $0x58] sm:$0xff] %vm1075, %v652
  %1120 = vst.msk [vmem:[%s7 + $0x60] sm:$0xff] %vm1075, %v657
  %1121 = vst.msk [vmem:[%s7 + $0x68] sm:$0xff] %vm1075, %v662
  %1122 = vst.msk [vmem:[%s7 + $0x70] sm:$0xff] %vm1075, %v667
  %1123 = vst.msk [vmem:[%s7 + $0x78] sm:$0xff] %vm1075, %v672
  %1124 = vst.msk [vmem:[%s7 + $0x80] sm:$0xff] %vm1075, %v677
  %1125 = vst.msk [vmem:[%s7 + $0x88] sm:$0xff] %vm1075, %v682
  %1126 = vst.msk [vmem:[%s7 + $0x90] sm:$0xff] %vm1075, %v687
  %1127 = vst.msk [vmem:[%s7 + $0x98] sm:$0xff] %vm1075, %v692
  %1128 = vst.msk [vmem:[%s7 + $0xa0] sm:$0xff] %vm1075, %v697
  %1129 = vst.msk [vmem:[%s7 + $0xa8] sm:$0xff] %vm1075, %v702
  %1130 = vst.msk [vmem:[%s7 + $0xb0] sm:$0xff] %vm1075, %v707
  %1131 = vst.msk [vmem:[%s7 + $0xb8] sm:$0xff] %vm1075, %v712
  %1132 = vst.msk [vmem:[%s7 + $0xc0] sm:$0xff] %vm1075, %v717
  %1133 = vst.msk [vmem:[%s7 + $0xc8] sm:$0xff] %vm1075, %v722
  %1134 = vst.msk [vmem:[%s7 + $0xd0] sm:$0xff] %vm1075, %v727
  %1135 = vst.msk [vmem:[%s7 + $0xd8] sm:$0xff] %vm1075, %v732
  %1136 = vst.msk [vmem:[%s7 + $0xe0] sm:$0xff] %vm1075, %v737
  %1137 = vst.msk [vmem:[%s7 + $0xe8] sm:$0xff] %vm1075, %v742
  %1138 = vst.msk [vmem:[%s7 + $0xf0] sm:$0xff] %vm1075, %v747
  %1139 = vst.msk [vmem:[%s7 + $0xf8] sm:$0xff] %vm1075, %v752
  %1140 = vst.msk [vmem:[%s8] sm:$0xff] %vm1075, %v948
  %1141 = vst.msk [vmem:[%s8 + $0x8] sm:$0xff] %vm1075, %v950
  %1142 = vst.msk [vmem:[%s8 + $0x10] sm:$0xff] %vm1075, %v952
  %1143 = vst.msk [vmem:[%s8 + $0x18] sm:$0xff] %vm1075, %v954
  %1144 = vst.msk [vmem:[%s8 + $0x20] sm:$0xff] %vm1075, %v956
  %1145 = vst.msk [vmem:[%s8 + $0x28] sm:$0xff] %vm1075, %v958
  %1146 = vst.msk [vmem:[%s8 + $0x30] sm:$0xff] %vm1075, %v960
  %1147 = vst.msk [vmem:[%s8 + $0x38] sm:$0xff] %vm1075, %v962
  %1148 = vst.msk [vmem:[%s8 + $0x40] sm:$0xff] %vm1075, %v964
  %1149 = vst.msk [vmem:[%s8 + $0x48] sm:$0xff] %vm1075, %v966
  %1150 = vst.msk [vmem:[%s8 + $0x50] sm:$0xff] %vm1075, %v968
  %1151 = vst.msk [vmem:[%s8 + $0x58] sm:$0xff] %vm1075, %v970
  %1152 = vst.msk [vmem:[%s8 + $0x60] sm:$0xff] %vm1075, %v972
  %1153 = vst.msk [vmem:[%s8 + $0x68] sm:$0xff] %vm1075, %v974
  %1154 = vst.msk [vmem:[%s8 + $0x70] sm:$0xff] %vm1075, %v976
  %1155 = vst.msk [vmem:[%s8 + $0x78] sm:$0xff] %vm1075, %v978
  %1156 = vst.msk [vmem:[%s8 + $0x80] sm:$0xff] %vm1075, %v980
  %1157 = vst.msk [vmem:[%s8 + $0x88] sm:$0xff] %vm1075, %v982
  %1158 = vst.msk [vmem:[%s8 + $0x90] sm:$0xff] %vm1075, %v984
  %1159 = vst.msk [vmem:[%s8 + $0x98] sm:$0xff] %vm1075, %v986
  %1160 = vst.msk [vmem:[%s8 + $0xa0] sm:$0xff] %vm1075, %v988
  %1161 = vst.msk [vmem:[%s8 + $0xa8] sm:$0xff] %vm1075, %v990
  %1162 = vst.msk [vmem:[%s8 + $0xb0] sm:$0xff] %vm1075, %v992
  %1163 = vst.msk [vmem:[%s8 + $0xb8] sm:$0xff] %vm1075, %v994
  %1164 = vst.msk [vmem:[%s8 + $0xc0] sm:$0xff] %vm1075, %v996
  %1165 = vst.msk [vmem:[%s8 + $0xc8] sm:$0xff] %vm1075, %v998
  %1166 = vst.msk [vmem:[%s8 + $0xd0] sm:$0xff] %vm1075, %v1000
  %1167 = vst.msk [vmem:[%s8 + $0xd8] sm:$0xff] %vm1075, %v1002
  %1168 = vst.msk [vmem:[%s8 + $0xe0] sm:$0xff] %vm1075, %v1004
  %1169 = vst.msk [vmem:[%s8 + $0xe8] sm:$0xff] %vm1075, %v1006
  %1170 = vst.msk [vmem:[%s8 + $0xf0] sm:$0xff] %vm1075, %v1008
  %1171 = vst.msk [vmem:[%s8 + $0xf8] sm:$0xff] %vm1075, %v1010
  // Predicated region
  $region26: #{tpu_custom_call.1} parent=0 // pred_check
    _
  $region27: #{tpu_custom_call.1} parent=0 // pred_check_branch
    %1173 = sbr.rel (0) target = $region29
  $region28: #{tpu_custom_call.1} parent=0 // pred_region
    _
  $region29: #{tpu_custom_call.1} parent=0 // pred_fallthru
    _
  // Predicated region
  $region30: #{tpu_custom_call.1} parent=0 // pred_check
    _
  $region31: #{tpu_custom_call.1} parent=0 // pred_check_branch
    %1175 = sbr.rel (0) target = $region33
  $region32: #{tpu_custom_call.1} parent=0 // pred_region
    _
  $region33: #{tpu_custom_call.1} parent=0 // pred_fallthru
    _
  // Predicated region
  $region34: #{tpu_custom_call.1} parent=0 // pred_check
    _
  $region35: #{tpu_custom_call.1} parent=0 // pred_check_branch
    %1177 = sbr.rel (0) target = $region37
  $region36: #{tpu_custom_call.1} parent=0 // pred_region
    _
  $region37: #{tpu_custom_call.1} parent=0 // pred_fallthru
    _
  // Predicated region
  $region38: #{tpu_custom_call.1} parent=0 // pred_check
    _
  $region39: #{tpu_custom_call.1} parent=0 // pred_check_branch
    %1179 = sbr.rel (0) target = $region41
  $region40: #{tpu_custom_call.1} parent=0 // pred_region
    _
  $region41: #{tpu_custom_call.1} parent=0 // pred_fallthru
    _
  // Predicated region
  $region42: #{tpu_custom_call.1} parent=0 // pred_check
    _
  $region43: #{tpu_custom_call.1} parent=0 // pred_check_branch
    %1181 = sbr.rel (0) target = $region45
  $region44: #{tpu_custom_call.1} parent=0 // pred_region
    _
  $region45: #{tpu_custom_call.1} parent=0 // pred_fallthru
    _
  // Predicated region
  $region46: #{tpu_custom_call.1} parent=0 // pred_check
    _
  $region47: #{tpu_custom_call.1} parent=0 // pred_check_branch
    %1183 = sbr.rel (0) target = $region49
  $region48: #{tpu_custom_call.1} parent=0 // pred_region
    _
  $region49: #{tpu_custom_call.1} parent=0 // pred_fallthru
    _

</llo_original>
